<compile_context>
chip_gen: v7x
topology: tpu7x:2x2x1
jax: 0.10.0
libtpu: 0.0.40
codegen_flags: <defaults>
</compile_context>

<pallas_src>
import jax
import jax.numpy as jnp
from jax import lax
from jax.experimental import pallas as pl
from jax.experimental.pallas import tpu as pltpu

_LANE = 128


# --------------------------------------------------------------------------
# Kernels
# --------------------------------------------------------------------------
def _td_fast_kernel(x_ref, w_ref, b_ref, o_ref):
    # Fast path: full reduction dim in one block -> no scratch, single store.
    # x_ref: (1, K, tt)  w_ref: (do_t, K)  b_ref: (do_t, 1)  o_ref: (1, do_t, tt)
    o_ref[0] = (jnp.dot(w_ref[...], x_ref[0],
                        preferred_element_type=jnp.float32)
                + b_ref[...].astype(jnp.float32)).astype(o_ref.dtype)


def _td_acc_kernel(x_ref, w_ref, b_ref, o_ref, acc_ref):
    # Tiled-K path: assign on k==0, accumulate afterwards, fused final store.
    # x_ref: (1, tk, tt)  w_ref: (do_t, tk)  b_ref: (do_t, 1)
    # o_ref: (1, do_t, tt)  acc_ref: (do_t, tt) f32 scratch
    k = pl.program_id(3)
    part = jnp.dot(w_ref[...], x_ref[0], preferred_element_type=jnp.float32)

    @pl.when(k == 0)
    def _first():
        acc_ref[...] = part

    @pl.when(k != 0)
    def _rest():
        acc_ref[...] += part

    @pl.when(k == pl.num_programs(3) - 1)
    def _store():
        o_ref[0] = (acc_ref[...] + b_ref[...].astype(jnp.float32)
                    ).astype(o_ref.dtype)


def _linear2d_kernel(x_ref, w_ref, b_ref, o_ref):
    # ndim <= 2 path: y = x @ W.T + b, contraction on the last dim of both.
    # x_ref: (tn, Din)  w_ref: (Dout, Din)  b_ref: (1, Dout)  o_ref: (tn, Dout)
    o_ref[...] = (lax.dot_general(
        x_ref[...], w_ref[...],
        dimension_numbers=(((1,), (1,)), ((), ())),
        preferred_element_type=jnp.float32)
        + b_ref[...].astype(jnp.float32)).astype(o_ref.dtype)


# --------------------------------------------------------------------------
# Tiling / VMEM planning
# --------------------------------------------------------------------------
def _round_up(n, m):
    return ((n + m - 1) // m) * m


def _vmem_budgets():
    """(tile planning budget, vmem_limit_bytes) derived from the chip."""
    try:
        cap = pltpu.get_tpu_info().vmem_capacity_bytes
    except Exception:
        cap = 64 * 1024 * 1024  # conservative default (v7x per-TC)
    tile_budget = min(int(cap * 0.6), 96 * 1024 * 1024)
    vmem_limit = min(int(cap * 0.75), 112 * 1024 * 1024)
    return tile_budget, vmem_limit


def _plan(B, Din, T, Dout, itemsize, budget):
    """Pick (do_t, Dout_p, tk, Kp, k_tiled, tt, Tp)."""
    # ---- Dout tile (MXU-sized when large; whole when small) --------------
    if Dout <= 512:
        do_t = Dout
    elif Dout % 512 == 0:
        do_t = 512
    elif Dout % 256 == 0:
        do_t = 256
    elif Dout % 128 == 0:
        do_t = 128
    else:
        do_t = 256
    Dout_p = _round_up(Dout, do_t)

    # ---- K: keep untiled while the (double-buffered) W block fits --------
    w_block_bytes = 2 * do_t * Din * itemsize
    if w_block_bytes <= budget // 3:
        tk, Kp, k_tiled = Din, Din, False
    else:
        tk = max(512, ((budget // 3) // (2 * do_t * itemsize)) // _LANE * _LANE)
        Kp, k_tiled = _round_up(Din, tk), True
        w_block_bytes = 2 * do_t * tk * itemsize

    # ---- T: lane-dense, as large as fits --------------------------------
    def fits(tt):
        x_b = 2 * tk * tt * itemsize
        out_b = 2 * do_t * tt * itemsize
        acc_b = (do_t * tt * 4) if k_tiled else 0
        return w_block_bytes + x_b + out_b + acc_b <= budget

    if T % _LANE == 0:
        tt, Tp = _LANE, T
        for cand in (1024, 512, 256, _LANE):
            if T % cand == 0 and fits(cand):
                tt = cand
                break
        # Best-effort: give v7x's two TensorCores >= 2 parallel tiles.
        if B * (Dout_p // do_t) * (T // tt) < 2 and T % 256 == 0:
            tt = min(tt, T // 2)
    elif T <= 4096 and fits(_round_up(T, _LANE)):
        # Full-T block: bypasses the 128-lane constraint, no jnp.pad pre-pass.
        tt, Tp = T, T
    else:
        Tp = _round_up(T, _LANE)
        tt = _LANE
        for cand in (1024, 512, 256, _LANE):
            if Tp % cand == 0 and fits(cand):
                tt = cand
                break
    return do_t, Dout_p, tk, Kp, k_tiled, tt, Tp


# --------------------------------------------------------------------------
# Wrapper: y[b] = W @ x[b] + bias,  x:(B,Din,T), W:(Dout,Din), bias:(Dout,)
# --------------------------------------------------------------------------
def td_linear_batched(x, w, b, *, use_bf16=False):
    """x:(B, Din, T), w:(Dout, Din), b:(Dout,) -> (B, Dout, T)."""
    B, Din, T = x.shape
    Dout = w.shape[0]
    out_dtype = x.dtype

    itemsize = 2 if use_bf16 else x.dtype.itemsize
    budget, vmem_limit = _vmem_budgets()
    do_t, Dout_p, tk, Kp, k_tiled, tt, Tp = _plan(
        B, Din, T, Dout, itemsize, budget)

    # ---- pad only when strictly required (no-op on the common path) ------
    xp, wp, bp = x, w, b
    if Tp != T or Kp != Din:
        xp = jnp.pad(x, ((0, 0), (0, Kp - Din), (0, Tp - T)))
    if Kp != Din or Dout_p != Dout:
        wp = jnp.pad(w, ((0, Dout_p - Dout), (0, Kp - Din)))
    if Dout_p != Dout:
        bp = jnp.pad(b, (0, Dout_p - Dout))
    if use_bf16:
        xp = xp.astype(jnp.bfloat16)
        wp = wp.astype(jnp.bfloat16)
    b2 = bp.reshape(Dout_p, 1).astype(jnp.float32)

    n_do, n_t, n_k = Dout_p // do_t, Tp // tt, Kp // tk

    # ---- cost estimate (reflects W re-streaming when K is tiled) ---------
    flops = 2 * B * Tp * Kp * Dout_p
    x_bytes = B * Kp * Tp * itemsize
    if k_tiled:
        w_bytes = B * n_t * Dout_p * Kp * itemsize
    else:
        w_bytes = Dout_p * Kp * itemsize * (B * n_do if n_do > 1 else 1)
    out_bytes = B * Dout_p * Tp * out_dtype.itemsize
    bytes_accessed = int(x_bytes + w_bytes + out_bytes + Dout_p * 4)

    if not k_tiled:
        grid = (B, n_do, n_t)
        kernel = _td_fast_kernel
        in_specs = [
            pl.BlockSpec((1, Kp, tt), lambda bi, di, ti: (bi, 0, ti)),
            pl.BlockSpec((do_t, Kp), lambda bi, di, ti: (di, 0)),
            pl.BlockSpec((do_t, 1), lambda bi, di, ti: (di, 0)),
        ]
        out_specs = pl.BlockSpec((1, do_t, tt),
                                 lambda bi, di, ti: (bi, di, ti))
        scratch = []
        semantics = ("parallel", "parallel", "parallel")
    else:
        grid = (B, n_do, n_t, n_k)
        kernel = _td_acc_kernel
        in_specs = [
            pl.BlockSpec((1, tk, tt), lambda bi, di, ti, ki: (bi, ki, ti)),
            pl.BlockSpec((do_t, tk), lambda bi, di, ti, ki: (di, ki)),
            pl.BlockSpec((do_t, 1), lambda bi, di, ti, ki: (di, 0)),
        ]
        out_specs = pl.BlockSpec((1, do_t, tt),
                                 lambda bi, di, ti, ki: (bi, di, ti))
        scratch = [pltpu.VMEM((do_t, tt), jnp.float32)]
        semantics = ("parallel", "parallel", "parallel", "arbitrary")

    y = pl.pallas_call(
        kernel,
        out_shape=jax.ShapeDtypeStruct((B, Dout_p, Tp), out_dtype),
        grid_spec=pltpu.PrefetchScalarGridSpec(
            num_scalar_prefetch=0,
            grid=grid,
            in_specs=in_specs,
            out_specs=out_specs,
            scratch_shapes=scratch,
        ),
        compiler_params=pltpu.CompilerParams(
            dimension_semantics=semantics,
            vmem_limit_bytes=vmem_limit,
        ),
        cost_estimate=pl.CostEstimate(
            flops=flops, transcendentals=0, bytes_accessed=bytes_accessed),
    )(xp, wp, b2)

    if Dout_p != Dout or Tp != T:
        y = y[:, :Dout, :T]
    return y


# --------------------------------------------------------------------------
# ndim <= 2 path: plain Linear, no permutes (matches the module's early return)
# --------------------------------------------------------------------------
def _linear_2d(x2, w, b):
    """x2:(N, Din) -> (N, Dout) = x2 @ W.T + b, no wrapper-side transposes."""
    N, Din = x2.shape
    Dout = w.shape[0]
    _, vmem_limit = _vmem_budgets()

    tn = N
    for cand in (512, 256, 128):
        if N % cand == 0 and N > cand:
            tn = cand
            break
    grid = (N // tn,)

    return pl.pallas_call(
        _linear2d_kernel,
        out_shape=jax.ShapeDtypeStruct((N, Dout), x2.dtype),
        grid_spec=pltpu.PrefetchScalarGridSpec(
            num_scalar_prefetch=0,
            grid=grid,
            in_specs=[
                pl.BlockSpec((tn, Din), lambda i: (i, 0)),
                pl.BlockSpec((Dout, Din), lambda i: (0, 0)),
                pl.BlockSpec((1, Dout), lambda i: (0, 0)),
            ],
            out_specs=pl.BlockSpec((tn, Dout), lambda i: (i, 0)),
        ),
        compiler_params=pltpu.CompilerParams(
            dimension_semantics=("parallel",),
            vmem_limit_bytes=vmem_limit,
        ),
    )(x2, w, b.reshape(1, Dout).astype(jnp.float32))


# --------------------------------------------------------------------------
# TimeDistributed(nn.Linear).forward
# --------------------------------------------------------------------------
def time_distributed_forward(x, w, b, *, use_bf16=False):
    """w: (D_out, D_in) PyTorch Linear weight layout, b: (D_out,)."""
    assert x.ndim <= 3
    if x.ndim <= 2:
        # Module applies the Linear directly (no permutes) for ndim <= 2.
        x2 = x if x.ndim == 2 else x.reshape(1, -1)
        y = _linear_2d(x2, w, b)
        return y if x.ndim == 2 else y.reshape(-1)

    # 3-D: x (B, D_in, T) -> y (B, D_out, T); computed as W @ x[b] + bias,
    # so neither input nor output needs an HBM transpose.
    return td_linear_batched(x, w, b, use_bf16=use_bf16)


# --------------------------------------------------------------------------
if __name__ == "__main__":
    key = jax.random.PRNGKey(0)
    kx, kw, kb, kx2, kx3 = jax.random.split(key, 5)

    # Small shapes consistent with the module: x is (batch, features, time).
    B, D_in, T, D_out = 2, 32, 128, 16

    w = jax.random.normal(kw, (D_out, D_in), dtype=jnp.float32) * 0.1
    b = jax.random.normal(kb, (D_out,), dtype=jnp.float32) * 0.1
    x = jax.random.normal(kx, (B, D_in, T), dtype=jnp.float32)

    # Main 3-D path (aligned: fast kernel, no padding, no transposes).
    y = jax.block_until_ready(time_distributed_forward(x, w, b))
    ref = jnp.einsum("od,bdt->bot", w, x) + b[None, :, None]
    assert y.shape == (B, D_out, T), y.shape
    assert jnp.allclose(y, ref, atol=1e-5, rtol=1e-5)

    # Unaligned T exercises the full-T (no-pad) edge path.
    T2 = 20
    x_u = jax.random.normal(kx2, (B, D_in, T2), dtype=jnp.float32)
    y_u = jax.block_until_ready(time_distributed_forward(x_u, w, b))
    ref_u = jnp.einsum("od,bdt->bot", w, x_u) + b[None, :, None]
    assert y_u.shape == (B, D_out, T2), y_u.shape
    assert jnp.allclose(y_u, ref_u, atol=1e-5, rtol=1e-5)

    # 2-D input path (Linear applied directly, per the module's early return).
    x2d = jax.random.normal(kx3, (8, D_in), dtype=jnp.float32)
    y2d = jax.block_until_ready(time_distributed_forward(x2d, w, b))
    assert jnp.allclose(y2d, x2d @ w.T + b, atol=1e-5, rtol=1e-5)

    # 1-D input path.
    x1d = x2d[0]
    y1d = jax.block_until_ready(time_distributed_forward(x1d, w, b))
    assert y1d.shape == (D_out,)
    assert jnp.allclose(y1d, x1d @ w.T + b, atol=1e-5, rtol=1e-5)

    print("KERNEL_OK")
</pallas_src>

<mosaic_0001>
module attributes {stable_mosaic.version = 11 : i64} {
  func.func @_td_fast_kernel(%arg0: i32, %arg1: i32, %arg2: i32, %arg3: memref<1x32x128xf32, #tpu.memory_space<vmem>>, %arg4: memref<16x32xf32, #tpu.memory_space<vmem>>, %arg5: memref<16x1xf32, #tpu.memory_space<vmem>>, %arg6: memref<1x16x128xf32, #tpu.memory_space<vmem>>) attributes {dimension_semantics = [#tpu.dimension_semantics<parallel>, #tpu.dimension_semantics<parallel>, #tpu.dimension_semantics<parallel>], iteration_bounds = array<i64: 2, 1, 1>, scalar_prefetch = 0 : i64, scratch_operands = 0 : i64, tpu.core_type = #tpu.core_type<tc>, window_params = [{transform_indices = @transform_0, window_bounds = array<i64: 1, 32, 128>}, {transform_indices = @transform_1, window_bounds = array<i64: 16, 32>}, {transform_indices = @transform_2, window_bounds = array<i64: 16, 1>}, {transform_indices = @transform_3, window_bounds = array<i64: 1, 16, 128>}]} {
    %c0 = arith.constant 0 : index
    %c0_0 = arith.constant 0 : index
    %0 = vector.load %arg4[%c0, %c0_0] : memref<16x32xf32, #tpu.memory_space<vmem>>, vector<16x32xf32>
    %c0_1 = arith.constant 0 : index
    %c0_2 = arith.constant 0 : index
    %c0_3 = arith.constant 0 : index
    %1 = vector.load %arg3[%c0_1, %c0_2, %c0_3] : memref<1x32x128xf32, #tpu.memory_space<vmem>>, vector<1x32x128xf32>
    %2 = vector.shape_cast %1 : vector<1x32x128xf32> to vector<32x128xf32>
    %cst = arith.constant dense<0.000000e+00> : vector<16x128xf32>
    %3 = tpu.matmul %0, %2, %cst {dimension_numbers = #tpu.dot_dimension_numbers<[1], [0], [0], [1], [0, 0, 1, 1], [], []>} : vector<16x32xf32>, vector<32x128xf32>, vector<16x128xf32> -> vector<16x128xf32>
    %c0_4 = arith.constant 0 : index
    %c0_5 = arith.constant 0 : index
    %4 = vector.load %arg5[%c0_4, %c0_5] : memref<16x1xf32, #tpu.memory_space<vmem>>, vector<16x1xf32>
    %5 = vector.broadcast %4 : vector<16x1xf32> to vector<16x128xf32>
    %6 = arith.addf %3, %5 : vector<16x128xf32>
    %c0_6 = arith.constant 0 : index
    %c0_7 = arith.constant 0 : index
    %c0_8 = arith.constant 0 : index
    %7 = vector.load %arg6[%c0_6, %c0_7, %c0_8] : memref<1x16x128xf32, #tpu.memory_space<vmem>>, vector<1x16x128xf32>
    %8 = vector.shape_cast %7 : vector<1x16x128xf32> to vector<16x128xf32>
    %9 = vector.shape_cast %6 : vector<16x128xf32> to vector<1x16x128xf32>
    tpu.vector_store %arg6[%c0_6, %c0_7, %c0_8], %9 {strides = array<i32>} : memref<1x16x128xf32, #tpu.memory_space<vmem>>, vector<1x16x128xf32>,
    return
  }
  func.func @transform_0(%arg0: i32, %arg1: i32, %arg2: i32) -> (i32, i32, i32) {
    %c0_i32 = arith.constant 0 : i32
    %c0_i32_0 = arith.constant 0 : i32
    return %arg0, %c0_i32, %arg2 : i32, i32, i32
  }
  func.func @transform_1(%arg0: i32, %arg1: i32, %arg2: i32) -> (i32, i32) {
    %c0_i32 = arith.constant 0 : i32
    %c0_i32_0 = arith.constant 0 : i32
    return %arg1, %c0_i32 : i32, i32
  }
  func.func @transform_2(%arg0: i32, %arg1: i32, %arg2: i32) -> (i32, i32) {
    %c0_i32 = arith.constant 0 : i32
    %c0_i32_0 = arith.constant 0 : i32
    return %arg1, %c0_i32 : i32, i32
  }
  func.func @transform_3(%arg0: i32, %arg1: i32, %arg2: i32) -> (i32, i32, i32) {
    %c0_i32 = arith.constant 0 : i32
    return %arg0, %arg1, %arg2 : i32, i32, i32
  }
}

</mosaic_0001>

<llo_original>
// kernel: tpu_custom_call.1
$region0: #{tpu_custom_call.1}
  #allocation0 [shape = 'u32[]', space=smem, size = 0x4, offset = 0x4, fixed_abs, tag = 'smem constant byte address 0x4 - core index']
  #allocation1 [shape = 'u32[144,128]{1,0:T(1,128)}', space=vmem, size = 0x12000, scoped, tag = 'internal scratch']
  %s0 = inlined_call_operand.hbm [shape: f32[2,32,128], index: 0, kind: input, shape index: {}]
  %s1 = inlined_call_operand.vmem [shape: f32[16,32], index: 1, kind: input, shape index: {}]
  %s2 = inlined_call_operand.vmem [shape: f32[16,1], index: 2, kind: input, shape index: {}]
  %s3 = inlined_call_operand.hbm [shape: f32[2,16,128], index: 3, kind: output, shape index: {}]
  %s4 = sld [smem:[#allocation0]]
  $region49: #{tpu_custom_call.1} parent=0
    _
  %s6 = ssub.s32 1, %s4
  %s7 = scalar_select 0, %s6, %s4
  $region1: #{tpu_custom_call.1} parent=0
    #allocation2 [shape = 'u8[32768]{0}', space=vmem, size = 0x8000, scoped, tag = 'input window, operand 0']
    #allocation3 [shape = 's32[2]{0}', space=sflag, size = 0x8, scoped, tag = 'scoped memory for tpu_custom_call.1']
    #allocation4 [shape = 's32[2]{0}', space=sflag, size = 0x8, scoped, tag = 'scoped memory for tpu_custom_call.1']
    #allocation5 [shape = 'u8[16384]{0}', space=vmem, size = 0x4000, scoped, tag = 'output window, operand 0']
    %8 = vsyncpa [#allocation3], 0
    %s9 = scalar_lea.sflag [#allocation3], 1
    %10 = vsyncpa %s9, 0
    %11 = vsyncpa [#allocation4], 0
    %s12 = scalar_lea.sflag [#allocation4], 1
    %13 = vsyncpa %s12, 0
    loop: start=0, step=1, limit=4
    $region2: #{tpu_custom_call.1} parent=1 // loop_pre_header
      _
    $region3: #{tpu_custom_call.1} parent=1 // loop_header
      %s15 = sphi 0, %s19
      %p16 = scmp.ge.s32.totalorder %s15, 4
      %s22 = sphi 0, %s41
      %s23 = sphi 0, %s37
      %s24 = sphi 0, %s33
      %s25 = sphi 0, %s22
      %s26 = sphi 0, %s23
      %s27 = sphi 0, %s24
      %s28 = sphi 0, %s25
      %s29 = sphi 0, %s26
      %s30 = sphi 0, %s27
      %s46 = sphi 0, %s48
      %s49 = sphi 0, %s46
      %s50 = sphi 0, %s49
      %s66 = sphi 0, %s50
      %s72 = sphi 0, %s74
      %s75 = sphi 0, %s72
      %s76 = sphi 0, %s75
      %s92 = sphi 0, %s76
      %s98 = sphi 0, %s100
      %s101 = sphi 0, %s98
      %s102 = sphi 0, %s101
      %s118 = sphi 0, %s102
      %s128 = sphi 0, %s130
      %s131 = sphi 0, %s128
      %s132 = sphi 0, %s131
      %s148 = sphi 0, %s132
    $region4: #{tpu_custom_call.1} parent=1 // loop_header_branch
      %18 = sbr.rel (%p16) target = $region8
    $region5: #{tpu_custom_call.1} parent=1 // loop_body
      %s20 = ssub.s32 %s15, 1
      %s21 = ssub.s32 %s15, 2
      %s31 = sadd.s32 1, %s24
      %p32 = scmp.ge.s32.totalorder %s31, 1
      %s33 = scalar_select %p32, 0, %s31
      %s34 = sadd.s32 1, %s23
      %s35 = scalar_select %p32, %s34, %s23
      %p36 = scmp.ge.s32.totalorder %s35, 1
      %s37 = scalar_select %p36, 0, %s35
      %s38 = sadd.s32 1, %s22
      %s39 = scalar_select %p36, %s38, %s22
      %p40 = scmp.ge.s32.totalorder %s39, 2
      %s41 = scalar_select %p40, 0, %s39
      %s42 = ssub.s32 %s22, %s41
      %s43 = ssub.s32 %s24, %s33
      %s44 = sor.u32 %s42, %s43
      %p45 = scmp.eq.s32.totalorder %s44, 0
      %s47 = sadd.s32 %s46, 1
      %s48 = scalar_select %p45, %s46, %s47
      %p51 = pneg %p45
      %p52 = scmp.eq.s32.totalorder %s15, 1
      %p53 = por %p51, %p52
      %p54 = scmp.ne.s32.totalorder %s46, %s49
      %p55 = scmp.eq.s32.totalorder %s15, 0
      %p56 = por %p54, %p55
      %p57 = scmp.ne.s32.totalorder %s46, %s49
      %p58 = scmp.eq.s32.totalorder %s20, 1
      %p59 = por %p57, %p58
      %p60 = scmp.ne.s32.totalorder %s49, %s50
      %p61 = scmp.eq.s32.totalorder %s20, 0
      %p62 = por %p60, %p61
      %p63 = scmp.ne.s32.totalorder %s49, %s50
      %p64 = scmp.eq.s32.totalorder %s21, 1
      %p65 = por %p63, %p64
      %p67 = scmp.ne.s32.totalorder %s50, %s66
      %p68 = scmp.eq.s32.totalorder %s21, 0
      %p69 = por %p67, %p68
      %s70 = ssub.s32 %s23, %s37
      %p71 = scmp.eq.s32.totalorder %s70, 0
      %s73 = sadd.s32 %s72, 1
      %s74 = scalar_select %p71, %s72, %s73
      %p77 = pneg %p71
      %p78 = scmp.eq.s32.totalorder %s15, 1
      %p79 = por %p77, %p78
      %p80 = scmp.ne.s32.totalorder %s72, %s75
      %p81 = scmp.eq.s32.totalorder %s15, 0
      %p82 = por %p80, %p81
      %p83 = scmp.ne.s32.totalorder %s72, %s75
      %p84 = scmp.eq.s32.totalorder %s20, 1
      %p85 = por %p83, %p84
      %p86 = scmp.ne.s32.totalorder %s75, %s76
      %p87 = scmp.eq.s32.totalorder %s20, 0
      %p88 = por %p86, %p87
      %p89 = scmp.ne.s32.totalorder %s75, %s76
      %p90 = scmp.eq.s32.totalorder %s21, 1
      %p91 = por %p89, %p90
      %p93 = scmp.ne.s32.totalorder %s76, %s92
      %p94 = scmp.eq.s32.totalorder %s21, 0
      %p95 = por %p93, %p94
      %s96 = ssub.s32 %s23, %s37
      %p97 = scmp.eq.s32.totalorder %s96, 0
      %s99 = sadd.s32 %s98, 1
      %s100 = scalar_select %p97, %s98, %s99
      %p103 = pneg %p97
      %p104 = scmp.eq.s32.totalorder %s15, 1
      %p105 = por %p103, %p104
      %p106 = scmp.ne.s32.totalorder %s98, %s101
      %p107 = scmp.eq.s32.totalorder %s15, 0
      %p108 = por %p106, %p107
      %p109 = scmp.ne.s32.totalorder %s98, %s101
      %p110 = scmp.eq.s32.totalorder %s20, 1
      %p111 = por %p109, %p110
      %p112 = scmp.ne.s32.totalorder %s101, %s102
      %p113 = scmp.eq.s32.totalorder %s20, 0
      %p114 = por %p112, %p113
      %p115 = scmp.ne.s32.totalorder %s101, %s102
      %p116 = scmp.eq.s32.totalorder %s21, 1
      %p117 = por %p115, %p116
      %p119 = scmp.ne.s32.totalorder %s102, %s118
      %p120 = scmp.eq.s32.totalorder %s21, 0
      %p121 = por %p119, %p120
      %s122 = ssub.s32 %s22, %s41
      %s123 = ssub.s32 %s23, %s37
      %s124 = sor.u32 %s122, %s123
      %s125 = ssub.s32 %s24, %s33
      %s126 = sor.u32 %s124, %s125
      %p127 = scmp.eq.s32.totalorder %s126, 0
      %s129 = sadd.s32 %s128, 1
      %s130 = scalar_select %p127, %s128, %s129
      %p133 = pneg %p127
      %p134 = scmp.eq.s32.totalorder %s15, 1
      %p135 = por %p133, %p134
      %p136 = scmp.ne.s32.totalorder %s128, %s131
      %p137 = scmp.eq.s32.totalorder %s15, 0
      %p138 = por %p136, %p137
      %p139 = scmp.ne.s32.totalorder %s128, %s131
      %p140 = scmp.eq.s32.totalorder %s20, 1
      %p141 = por %p139, %p140
      %p142 = scmp.ne.s32.totalorder %s131, %s132
      %p143 = scmp.eq.s32.totalorder %s20, 0
      %p144 = por %p142, %p143
      %p145 = scmp.ne.s32.totalorder %s131, %s132
      %p146 = scmp.eq.s32.totalorder %s21, 1
      %p147 = por %p145, %p146
      %p149 = scmp.ne.s32.totalorder %s132, %s148
      %p150 = scmp.eq.s32.totalorder %s21, 0
      %p151 = por %p149, %p150
      %p152 = scmp.le.s32.totalorder 1, %s15
      %p153 = scmp.lt.s32.totalorder %s15, 3
      %p154 = pnand %p152, %p153
      %p155 = pneg %p154
      // Predicated region
      $region9: #{tpu_custom_call.1} parent=5 // pred_check
        _
      $region10: #{tpu_custom_call.1} parent=5 // pred_check_branch
        %157 = sbr.rel (%p154) target = $region12
      $region11: #{tpu_custom_call.1} parent=5 // pred_region
        %s158 = ssub.s32 %s15, 1
        // Predicated region
        $region13: #{tpu_custom_call.1} parent=11 // pred_check
          %p159 = pneg %p88
        $region14: #{tpu_custom_call.1} parent=11 // pred_check_branch
          %161 = sbr.rel (%p159) target = $region16
        $region15: #{tpu_custom_call.1} parent=11 // pred_region
          %s162 = smul.u32 2, %s26
          %p163 = scmp.lt.s32.totalorder %s162, 1
          %s164 = scalar_select %p163, %s162, 1
          %s165 = smul.addr %s164, 8
          %s166 = scalar_lea.vmem %s1, %s165
          %s167 = smul.u32 2, %s26
        $region16: #{tpu_custom_call.1} parent=11 // pred_fallthru
          _
        // Predicated region
        $region17: #{tpu_custom_call.1} parent=11 // pred_check
          %p168 = pneg %p114
        $region18: #{tpu_custom_call.1} parent=11 // pred_check_branch
          %170 = sbr.rel (%p168) target = $region20
        $region19: #{tpu_custom_call.1} parent=11 // pred_region
          %s171 = smul.u32 2, %s26
          %p172 = scmp.lt.s32.totalorder %s171, 1
          %s173 = scalar_select %p172, %s171, 1
          %s174 = smul.addr %s173, 8
          %s175 = scalar_lea.vmem %s2, %s174
          %s176 = smul.u32 2, %s26
        $region20: #{tpu_custom_call.1} parent=11 // pred_fallthru
          _
      $region12: #{tpu_custom_call.1} parent=5 // pred_fallthru
        _
      %p177 = scmp.lt.s32.totalorder %s15, 2
      // Predicated region
      $region21: #{tpu_custom_call.1} parent=5 // pred_check
        %p178 = pneg %p177
      $region22: #{tpu_custom_call.1} parent=5 // pred_check_branch
        %180 = sbr.rel (%p178) target = $region24
      $region23: #{tpu_custom_call.1} parent=5 // pred_region
        // Predicated region
        $region25: #{tpu_custom_call.1} parent=23 // pred_check
          %p181 = pneg %p56
        $region26: #{tpu_custom_call.1} parent=23 // pred_check_branch
          %183 = sbr.rel (%p181) target = $region28
        $region27: #{tpu_custom_call.1} parent=23 // pred_region
          %s184 = sand.u32 %s46, 1
          %s185 = scalar_lea.sflag [#allocation3], %s184
          %s186 = sand.u32 %s46, 1
          %s187 = smul.addr %s186, 32
          %s188 = scalar_lea.vmem [#allocation2], %s187
          %s190 = ssub.s32 512, 512
          %191 = vsyncadd %s185, %s190
          %s192 = smul.addr %s22, 4
          %s193 = sadd.s32 %s24, %s192
          %s194 = smul.addr %s193, 128
          %s195 = scalar_lea.hbm %s0, %s194
          %s196 = sshll.u32 %s188, 4
          %s197 = int_to_ptr.vmem [resolvable:$true] %s196
          %202 = dma.hbm_to_vmem [thread:$0]  %s195, 512, %s197, %s185, 128, 128, 8
        $region28: #{tpu_custom_call.1} parent=23 // pred_fallthru
          _
      $region24: #{tpu_custom_call.1} parent=5 // pred_fallthru
        _
      %p203 = scmp.le.s32.totalorder 1, %s15
      %p204 = scmp.lt.s32.totalorder %s15, 3
      %p205 = pnand %p203, %p204
      %p206 = pneg %p205
      // Predicated region
      $region29: #{tpu_custom_call.1} parent=5 // pred_check
        _
      $region30: #{tpu_custom_call.1} parent=5 // pred_check_branch
        %208 = sbr.rel (%p205) target = $region32
      $region31: #{tpu_custom_call.1} parent=5 // pred_region
        %s209 = ssub.s32 %s15, 1
        %s210 = sand.u32 %s49, 1
        %s211 = scalar_lea.sflag [#allocation3], %s210
        %s212 = sand.u32 %s49, 1
        %s213 = smul.addr %s212, 32
        %s214 = scalar_lea.vmem [#allocation2], %s213
        // Predicated region
        $region33: #{tpu_custom_call.1} parent=31 // pred_check
          %p215 = pneg %p62
        $region34: #{tpu_custom_call.1} parent=31 // pred_check_branch
          %217 = sbr.rel (%p215) target = $region36
        $region35: #{tpu_custom_call.1} parent=31 // pred_region
          %218 = dma.done %s211, 512
        $region36: #{tpu_custom_call.1} parent=31 // pred_fallthru
          _
        %s219 = sand.u32 %s49, 1
        %s220 = scalar_lea.sflag [#allocation3], %s219
        %s221 = sand.u32 %s49, 1
        %s222 = smul.addr %s221, 32
        %s223 = scalar_lea.vmem [#allocation2], %s222
        %p224 = pneg %p62
        %p225 = pneg %p59
        %s226 = smul.u32 2, %s26
        %p227 = scmp.lt.s32.totalorder %s226, 1
        %s228 = scalar_select %p227, %s226, 1
        %s229 = smul.addr %s228, 8
        %s230 = scalar_lea.vmem %s1, %s229
        %p231 = pneg %p88
        %p232 = pneg %p85
        %s233 = smul.u32 2, %s26
        %p234 = scmp.lt.s32.totalorder %s233, 1
        %s235 = scalar_select %p234, %s233, 1
        %s236 = smul.addr %s235, 8
        %s237 = scalar_lea.vmem %s2, %s236
        %p238 = pneg %p114
        %p239 = pneg %p111
        %p240 = pneg %p144
        %p241 = pneg %p141
        %s242 = sand.u32 %s131, 1
        %s243 = scalar_lea.sflag [#allocation4], %s242
        %s244 = sand.u32 %s131, 1
        %s245 = smul.addr %s244, 16
        %s246 = scalar_lea.vmem [#allocation5], %s245
        %s247 = smul.u32 2, %s26
        %p248 = scmp.lt.s32.totalorder %s247, 1
        %s249 = scalar_select %p248, %s247, 1
        %s250 = smul.addr %s249, 8
        %s251 = scalar_lea.vmem %s1, %s250
        %s252 = smul.u32 2, %s26
        %s253 = smul.u32 2, %s26
        %p254 = scmp.lt.s32.totalorder %s253, 1
        %s255 = scalar_select %p254, %s253, 1
        %s256 = smul.addr %s255, 8
        %s257 = scalar_lea.vmem %s2, %s256
        %s258 = smul.u32 2, %s26
        %s259 = smul.u32 2, %s26
        %v260 = vld [vmem:[%s251] sm:$0xff]
        %v261 = vld [vmem:[%s251 + $0x8] sm:$0xff]
        %v262 = vld [vmem:[%s214] sm:$0xff]
        %v263 = vld [vmem:[%s214 + $0x8] sm:$0xff]
        %v264 = vld [vmem:[%s214 + $0x10] sm:$0xff]
        %v265 = vld [vmem:[%s214 + $0x18] sm:$0xff]
        %v266 = vld [vmem:[%s257] sm:$0xff]
        %v267 = vld [vmem:[%s257 + $0x8] sm:$0xff]
        %269 = vset.pattern.permute.xlu0 0
        %270 = vperm.xlu0 %269, %v266
        %v271 = vpop.permute.xlu0 %270
        %274 = vset.pattern.permute.xlu0 0
        %275 = vperm.xlu0 %274, %v267
        %v276 = vpop.permute.xlu0 %275
        %vm278 = vcmask 261120
        %v280 = vsel %vm278, %v260, 0
        %v283 = vsel %vm278, %v261, 0
        %285 = vmatprep.subr.mxu0 0.0
        %286 = vmatpush1.msra.mxu0 %v262
        %287 = vmatprep.subr.mxu0 0.0
        %288 = vmatpush1.msra.mxu0 %v263
        %289 = vmatprep.subr.mxu0 0.0
        %290 = vmatpush1.msra.mxu0 %v264
        %291 = vmatprep.subr.mxu0 0.0
        %292 = vmatpush1.msra.mxu0 %v265
        %293 = vmatprep.subr.mxu0 0.0
        %294 = vmatpush1.msra.mxu0 0.0
        %295 = vmatprep.subr.mxu0 0.0
        %296 = vmatpush1.msra.mxu0 0.0
        %297 = vmatprep.subr.mxu0 0.0
        %298 = vmatpush1.msra.mxu0 0.0
        %299 = vmatprep.subr.mxu0 0.0
        %300 = vmatpush1.msra.mxu0 0.0
        %301 = vmatprep.subr.mxu0 0.0
        %302 = vmatpush1.msra.mxu0 0.0
        %303 = vmatprep.subr.mxu0 0.0
        %304 = vmatpush1.msra.mxu0 0.0
        %305 = vmatprep.subr.mxu0 0.0
        %306 = vmatpush1.msra.mxu0 0.0
        %307 = vmatprep.subr.mxu0 0.0
        %308 = vmatpush1.msra.mxu0 0.0
        %309 = vmatprep.subr.mxu0 0.0
        %310 = vmatpush1.msra.mxu0 0.0
        %311 = vmatprep.subr.mxu0 0.0
        %312 = vmatpush1.msra.mxu0 0.0
        %313 = vmatprep.subr.mxu0 0.0
        %314 = vmatpush1.msra.mxu0 0.0
        %315 = vmatprep.subr.mxu0 0.0
        %316 = vmatpush1.msra.mxu0 0.0
        %317 = vmatprep.subr.mxu0 0.0
        %318 = vmatpush1.msra.mxu0 0.0
        %319 = vmatprep.subr.mxu0 0.0
        %320 = vmatpush1.msra.mxu0 0.0
        %321 = vmatprep.subr.mxu0 0.0
        %322 = vmatpush1.msra.mxu0 0.0
        %323 = vmatprep.subr.mxu0 0.0
        %324 = vmatpush1.msra.mxu0 0.0
        %325 = vmatprep.subr.mxu0 0.0
        %326 = vmatpush1.msra.mxu0 0.0
        %327 = vmatprep.subr.mxu0 0.0
        %328 = vmatpush1.msra.mxu0 0.0
        %329 = vmatprep.subr.mxu0 0.0
        %330 = vmatpush1.msra.mxu0 0.0
        %331 = vmatprep.subr.mxu0 0.0
        %332 = vmatpush1.msra.mxu0 0.0
        %333 = vmatprep.subr.mxu0 0.0
        %334 = vmatpush1.msra.mxu0 0.0
        %335 = vmatprep.subr.mxu0 0.0
        %336 = vmatpush1.msra.mxu0 0.0
        %337 = vmatprep.subr.mxu0 0.0
        %338 = vmatpush1.msra.mxu0 0.0
        %339 = vmatprep.subr.mxu0 0.0
        %340 = vmatpush1.msra.mxu0 0.0
        %341 = vmatprep.subr.mxu0 0.0
        %342 = vmatpush1.msra.mxu0 0.0
        %343 = vmatprep.subr.mxu0 0.0
        %344 = vmatpush1.msra.mxu0 0.0
        %345 = vmatprep.subr.mxu0 0.0
        %346 = vmatpush1.msra.mxu0 0.0
        %347 = vmatprep.subr.mxu0 0.0
        %348 = vmatpush1.msra.mxu0 0.0
        %349 = vmatprep.mubr.f32.mxu0 0.0
        %350 = vmatmul.mubr.f32.gmra.mrb[0].mxu0 %v280
        %v351 = vpop.f32.mrb[0].mxu0
        %v352 = vadd.f32 %v271, %v351
        %v353 = vpop.f32.mrb[0].mxu0
        %354 = vmatprep.mubr.f32.mxu0 0.0
        %355 = vmatmul.mubr.f32.gmra.mrb[0].mxu0 %v283
        %v356 = vpop.f32.mrb[0].mxu0
        %v357 = vadd.f32 %v276, %v356
        %v358 = vpop.f32.mrb[0].mxu0
        %359 = vdwg.mxu0
        %360 = vst [vmem:[%s246] sm:$0xff] %v352
        %361 = vst [vmem:[%s246 + $0x8] sm:$0xff] %v357
        %s362 = sand.u32 %s131, 1
        %s363 = scalar_lea.sflag [#allocation4], %s362
        %s364 = sand.u32 %s131, 1
        %s365 = smul.addr %s364, 16
        %s366 = scalar_lea.vmem [#allocation5], %s365
        // Predicated region
        $region37: #{tpu_custom_call.1} parent=31 // pred_check
          %p367 = pneg %p141
        $region38: #{tpu_custom_call.1} parent=31 // pred_check_branch
          %369 = sbr.rel (%p367) target = $region40
        $region39: #{tpu_custom_call.1} parent=31 // pred_region
          %s370 = smul.u32 2, %s26
          %s372 = ssub.s32 256, 256
          %373 = vsyncadd %s363, %s372
          %s374 = sadd.s32 %s27, %s370
          %s375 = smul.addr %s25, 2
          %s376 = sadd.s32 %s374, %s375
          %s377 = smul.addr %s376, 128
          %s378 = scalar_lea.hbm %s3, %s377
          %s379 = sshll.u32 %s366, 4
          %s380 = int_to_ptr.vmem [resolvable:$true] %s379
          %385 = dma.vmem_to_hbm [thread:$0]  %s380, 256, %s378, %s363, 128, 128, 8
        $region40: #{tpu_custom_call.1} parent=31 // pred_fallthru
          _
      $region32: #{tpu_custom_call.1} parent=5 // pred_fallthru
        _
      %p386 = scmp.le.s32.totalorder 2, %s15
      // Predicated region
      $region41: #{tpu_custom_call.1} parent=5 // pred_check
        %p387 = pneg %p386
      $region42: #{tpu_custom_call.1} parent=5 // pred_check_branch
        %389 = sbr.rel (%p387) target = $region44
      $region43: #{tpu_custom_call.1} parent=5 // pred_region
        %s390 = ssub.s32 %s15, 2
        // Predicated region
        $region45: #{tpu_custom_call.1} parent=43 // pred_check
          %p391 = pneg %p147
        $region46: #{tpu_custom_call.1} parent=43 // pred_check_branch
          %393 = sbr.rel (%p391) target = $region48
        $region47: #{tpu_custom_call.1} parent=43 // pred_region
          %s394 = sand.u32 %s132, 1
          %s395 = scalar_lea.sflag [#allocation4], %s394
          %s396 = sand.u32 %s132, 1
          %s397 = smul.addr %s396, 16
          %s398 = scalar_lea.vmem [#allocation5], %s397
          %399 = dma.done %s395, 256
        $region48: #{tpu_custom_call.1} parent=43 // pred_fallthru
          _
      $region44: #{tpu_custom_call.1} parent=5 // pred_fallthru
        _
    $region6: #{tpu_custom_call.1} parent=1 // loop_footer
      %s19 = sadd.s32 1, %s15
    $region7: #{tpu_custom_call.1} parent=1 // loop_footer_branch
      %14 = sbr.rel target = $region3
    $region8: #{tpu_custom_call.1} parent=1 // loop_exit
      _
    %400 = vsyncpa [#allocation3], 1
    %s401 = scalar_lea.sflag [#allocation3], 1
    %402 = vsyncpa %s401, 1
    %403 = vsyncpa [#allocation4], 1
    %s404 = scalar_lea.sflag [#allocation4], 1
    %405 = vsyncpa %s404, 1

</llo_original>
